<compile_context>
chip_gen: v7x
topology: tpu7x:2x2x1
jax: 0.10.0
libtpu: 0.0.40
codegen_flags: <defaults>
</compile_context>

<pallas_src>
import functools
import math

import jax
import jax.numpy as jnp
from jax import lax
from jax.experimental import pallas as pl
from jax.experimental.pallas import tpu as pltpu


def _quantize_loss_kernel(q_ref, v_ref, out_ref, *, scale):
    # q_ref / v_ref : (TR, D) in storage dtype.   out_ref : (TR, 1) float32.
    d = q_ref[...].astype(jnp.float32) - v_ref[...].astype(jnp.float32)   # VPU
    out_ref[...] = scale * jnp.sum(d * d, axis=-1, keepdims=True)         # XLU reduce


def _pick_row_tile(R, D, itemsize, target_bytes=2 << 20, max_rows=8192):
    """Rows per grid step targeting ~target_bytes of HBM traffic per input."""
    tr = max(8, target_bytes // max(1, D * itemsize))
    tr = min(tr, max_rows)
    tr = max(8, (tr // 8) * 8)                  # sublane-aligned block rows
    if R <= tr:
        if R > 2048:
            # keep >= 2 grid steps so both v7x TensorCores get a share
            half = -(-R // 2)
            tr = min(R, ((half + 7) // 8) * 8)
            return tr
        return R                                # single full-extent block (any R is legal)
    return tr


def quantize_loss(query, value, commitment_weight=1.0, *,
                  target_bytes=2 << 20, max_rows=8192):
    """Forward of QuantizeLoss for arbitrary (..., D) query/value tensors.

    Returns a float32 per-row loss of shape query.shape[:-1].
    """
    assert query.shape == value.shape
    *lead, D = query.shape
    R = math.prod(lead) if lead else 1

    # Free, contiguous reshape — no dtype cast (stream storage dtype straight in).
    q2 = query.reshape(R, D)
    v2 = value.reshape(R, D)

    TR = _pick_row_tile(R, D, q2.dtype.itemsize, target_bytes, max_rows)
    grid = (pl.cdiv(R, TR),)

    out = pl.pallas_call(
        functools.partial(_quantize_loss_kernel,
                          scale=float(1.0 + commitment_weight)),
        out_shape=jax.ShapeDtypeStruct((R, 1), jnp.float32),
        grid=grid,
        in_specs=[
            pl.BlockSpec((TR, D), lambda i: (i, 0)),
            pl.BlockSpec((TR, D), lambda i: (i, 0)),
        ],
        out_specs=pl.BlockSpec((TR, 1), lambda i: (i, 0)),
        compiler_params=pltpu.CompilerParams(
            dimension_semantics=("parallel",),
            vmem_limit_bytes=32 << 20,
        ),
    )(q2, v2)

    return out.reshape(tuple(lead)) if lead else out.reshape(())


def reference(query, value, commitment_weight=1.0):
    """Pure-JAX mirror of the PyTorch forward, for correctness checking."""
    emb_loss = jnp.sum((lax.stop_gradient(query) - value) ** 2, axis=-1)
    query_loss = jnp.sum((query - lax.stop_gradient(value)) ** 2, axis=-1)
    return emb_loss + commitment_weight * query_loss


if __name__ == "__main__":
    key = jax.random.PRNGKey(0)
    kq, kv = jax.random.split(key)

    # Small shapes consistent with the module: (batch, seq, embed_dim).
    B, N, D = 8, 16, 64
    query = jax.random.normal(kq, (B, N, D), dtype=jnp.float32)
    value = jax.random.normal(kv, (B, N, D), dtype=jnp.float32)
    cw = 0.25  # non-default commitment_weight to exercise the scale

    out = jax.block_until_ready(quantize_loss(query, value, commitment_weight=cw))
    ref = jax.block_until_ready(reference(query, value, commitment_weight=cw))
    assert out.shape == (B, N)
    assert out.dtype == jnp.float32
    assert jnp.allclose(out, ref, atol=1e-4, rtol=1e-4), \
        f"max abs err {jnp.max(jnp.abs(out - ref))}"

    # Second check: bf16 streaming + ragged multi-step grid (tail-masked block).
    kq2, kv2 = jax.random.split(jax.random.PRNGKey(1))
    q_bf = jax.random.normal(kq2, (3, 100, D), dtype=jnp.float32).astype(jnp.bfloat16)
    v_bf = jax.random.normal(kv2, (3, 100, D), dtype=jnp.float32).astype(jnp.bfloat16)
    out2 = jax.block_until_ready(
        quantize_loss(q_bf, v_bf, commitment_weight=cw, max_rows=64))  # 300 rows / 64-row tiles
    ref2 = reference(q_bf.astype(jnp.float32), v_bf.astype(jnp.float32), cw)
    assert out2.shape == (3, 100)
    assert out2.dtype == jnp.float32
    assert jnp.allclose(out2, ref2, atol=1e-3, rtol=1e-3), \
        f"max abs err {jnp.max(jnp.abs(out2 - ref2))}"

    print("KERNEL_OK")
</pallas_src>

<mosaic_0001>
module attributes {stable_mosaic.version = 11 : i64} {
  func.func @_quantize_loss_kernel(%arg0: i32, %arg1: memref<128x64xf32, #tpu.memory_space<vmem>>, %arg2: memref<128x64xf32, #tpu.memory_space<vmem>>, %arg3: memref<128x1xf32, #tpu.memory_space<vmem>>) attributes {dimension_semantics = [#tpu.dimension_semantics<parallel>], iteration_bounds = array<i64: 1>, scalar_prefetch = 0 : i64, scratch_operands = 0 : i64, tpu.core_type = #tpu.core_type<tc>, window_params = [{transform_indices = @transform_0, window_bounds = array<i64: 128, 64>}, {transform_indices = @transform_1, window_bounds = array<i64: 128, 64>}, {transform_indices = @transform_2, window_bounds = array<i64: 128, 1>}]} {
    %c0 = arith.constant 0 : index
    %c0_0 = arith.constant 0 : index
    %0 = vector.load %arg1[%c0, %c0_0] : memref<128x64xf32, #tpu.memory_space<vmem>>, vector<128x64xf32>
    %c0_1 = arith.constant 0 : index
    %c0_2 = arith.constant 0 : index
    %1 = vector.load %arg2[%c0_1, %c0_2] : memref<128x64xf32, #tpu.memory_space<vmem>>, vector<128x64xf32>
    %2 = arith.subf %0, %1 : vector<128x64xf32>
    %3 = arith.mulf %2, %2 : vector<128x64xf32>
    %cst = arith.constant dense<0.000000e+00> : vector<128xf32>
    %4 = vector.multi_reduction <add>, %3, %cst [1] : vector<128x64xf32> to vector<128xf32>
    %5 = vector.shape_cast %4 : vector<128xf32> to vector<128x1xf32>
    %cst_3 = arith.constant 1.250000e+00 : f32
    %6 = vector.broadcast %cst_3 : f32 to vector<128x1xf32>
    %7 = arith.mulf %6, %5 : vector<128x1xf32>
    %c0_4 = arith.constant 0 : index
    %c0_5 = arith.constant 0 : index
    %8 = vector.load %arg3[%c0_4, %c0_5] : memref<128x1xf32, #tpu.memory_space<vmem>>, vector<128x1xf32>
    tpu.vector_store %arg3[%c0_4, %c0_5], %7 {strides = array<i32>} : memref<128x1xf32, #tpu.memory_space<vmem>>, vector<128x1xf32>,
    return
  }
  func.func @transform_0(%arg0: i32) -> (i32, i32) {
    %c0_i32 = arith.constant 0 : i32
    %c0_i32_0 = arith.constant 0 : i32
    return %arg0, %c0_i32 : i32, i32
  }
  func.func @transform_1(%arg0: i32) -> (i32, i32) {
    %c0_i32 = arith.constant 0 : i32
    %c0_i32_0 = arith.constant 0 : i32
    return %arg0, %c0_i32 : i32, i32
  }
  func.func @transform_2(%arg0: i32) -> (i32, i32) {
    %c0_i32 = arith.constant 0 : i32
    %c0_i32_0 = arith.constant 0 : i32
    return %arg0, %c0_i32 : i32, i32
  }
}

</mosaic_0001>

<llo_original>
// kernel: tpu_custom_call.1
$region0: #{tpu_custom_call.1}
  #allocation0 [shape = 'u32[]', space=smem, size = 0x4, offset = 0x4, fixed_abs, tag = 'smem constant byte address 0x4 - core index']
  #allocation1 [shape = 'u32[144,128]{1,0:T(1,128)}', space=vmem, size = 0x12000, scoped, tag = 'internal scratch']
  %s0 = inlined_call_operand.vmem [shape: f32[128,64], index: 0, kind: input, shape index: {}]
  %s1 = inlined_call_operand.vmem [shape: f32[128,64], index: 1, kind: input, shape index: {}]
  %s2 = inlined_call_operand.vmem [shape: f32[128,1], index: 2, kind: output, shape index: {}]
  %s3 = sld [smem:[#allocation0]]
  $region18: #{tpu_custom_call.1} parent=0
    _
  %s5 = ssub.s32 1, %s3
  %s6 = scalar_select 0, %s5, %s3
  // Predicated region
  $region2: #{tpu_custom_call.1} parent=0 // pred_check
    _
  $region3: #{tpu_custom_call.1} parent=0 // pred_check_branch
    %8 = sbr.rel (0) target = $region5
  $region4: #{tpu_custom_call.1} parent=0 // pred_region
    _
  $region5: #{tpu_custom_call.1} parent=0 // pred_fallthru
    _
  // Predicated region
  $region6: #{tpu_custom_call.1} parent=0 // pred_check
    _
  $region7: #{tpu_custom_call.1} parent=0 // pred_check_branch
    %10 = sbr.rel (0) target = $region9
  $region8: #{tpu_custom_call.1} parent=0 // pred_region
    _
  $region9: #{tpu_custom_call.1} parent=0 // pred_fallthru
    _
  %v11 = vld [vmem:[%s0] sm:$0xff]
  %v12 = vld [vmem:[%s0 + $0x8] sm:$0xff]
  %v13 = vld [vmem:[%s0 + $0x10] sm:$0xff]
  %v14 = vld [vmem:[%s0 + $0x18] sm:$0xff]
  %v15 = vld [vmem:[%s0 + $0x20] sm:$0xff]
  %v16 = vld [vmem:[%s0 + $0x28] sm:$0xff]
  %v17 = vld [vmem:[%s0 + $0x30] sm:$0xff]
  %v18 = vld [vmem:[%s0 + $0x38] sm:$0xff]
  %v19 = vld [vmem:[%s0 + $0x40] sm:$0xff]
  %v20 = vld [vmem:[%s0 + $0x48] sm:$0xff]
  %v21 = vld [vmem:[%s0 + $0x50] sm:$0xff]
  %v22 = vld [vmem:[%s0 + $0x58] sm:$0xff]
  %v23 = vld [vmem:[%s0 + $0x60] sm:$0xff]
  %v24 = vld [vmem:[%s0 + $0x68] sm:$0xff]
  %v25 = vld [vmem:[%s0 + $0x70] sm:$0xff]
  %v26 = vld [vmem:[%s0 + $0x78] sm:$0xff]
  %v27 = vld [vmem:[%s1] sm:$0xff]
  %v28 = vld [vmem:[%s1 + $0x8] sm:$0xff]
  %v29 = vld [vmem:[%s1 + $0x10] sm:$0xff]
  %v30 = vld [vmem:[%s1 + $0x18] sm:$0xff]
  %v31 = vld [vmem:[%s1 + $0x20] sm:$0xff]
  %v32 = vld [vmem:[%s1 + $0x28] sm:$0xff]
  %v33 = vld [vmem:[%s1 + $0x30] sm:$0xff]
  %v34 = vld [vmem:[%s1 + $0x38] sm:$0xff]
  %v35 = vld [vmem:[%s1 + $0x40] sm:$0xff]
  %v36 = vld [vmem:[%s1 + $0x48] sm:$0xff]
  %v37 = vld [vmem:[%s1 + $0x50] sm:$0xff]
  %v38 = vld [vmem:[%s1 + $0x58] sm:$0xff]
  %v39 = vld [vmem:[%s1 + $0x60] sm:$0xff]
  %v40 = vld [vmem:[%s1 + $0x68] sm:$0xff]
  %v41 = vld [vmem:[%s1 + $0x70] sm:$0xff]
  %v42 = vld [vmem:[%s1 + $0x78] sm:$0xff]
  %v43 = vsub.f32 %v11, %v27
  %v44 = vsub.f32 %v12, %v28
  %v45 = vsub.f32 %v13, %v29
  %v46 = vsub.f32 %v14, %v30
  %v47 = vsub.f32 %v15, %v31
  %v48 = vsub.f32 %v16, %v32
  %v49 = vsub.f32 %v17, %v33
  %v50 = vsub.f32 %v18, %v34
  %v51 = vsub.f32 %v19, %v35
  %v52 = vsub.f32 %v20, %v36
  %v53 = vsub.f32 %v21, %v37
  %v54 = vsub.f32 %v22, %v38
  %v55 = vsub.f32 %v23, %v39
  %v56 = vsub.f32 %v24, %v40
  %v57 = vsub.f32 %v25, %v41
  %v58 = vsub.f32 %v26, %v42
  %v59 = vmul.f32 %v43, %v43
  %v60 = vmul.f32 %v44, %v44
  %v61 = vmul.f32 %v45, %v45
  %v62 = vmul.f32 %v46, %v46
  %v63 = vmul.f32 %v47, %v47
  %v64 = vmul.f32 %v48, %v48
  %v65 = vmul.f32 %v49, %v49
  %v66 = vmul.f32 %v50, %v50
  %v67 = vmul.f32 %v51, %v51
  %v68 = vmul.f32 %v52, %v52
  %v69 = vmul.f32 %v53, %v53
  %v70 = vmul.f32 %v54, %v54
  %v71 = vmul.f32 %v55, %v55
  %v72 = vmul.f32 %v56, %v56
  %v73 = vmul.f32 %v57, %v57
  %v74 = vmul.f32 %v58, %v58
  %vm75 = vcmask 523264
  %v76 = vsel %vm75, %v59, 0.0
  %77 = vadd.xlane.f32.xlu0 %v76
  %v78 = vpop.xlane.xlu0 %77
  %v79 = vsel %vm75, %v60, 0.0
  %80 = vadd.xlane.f32.xlu0 %v79
  %v81 = vpop.xlane.xlu0 %80
  %v82 = vsel %vm75, %v61, 0.0
  %83 = vadd.xlane.f32.xlu0 %v82
  %v84 = vpop.xlane.xlu0 %83
  %v85 = vsel %vm75, %v62, 0.0
  %86 = vadd.xlane.f32.xlu0 %v85
  %v87 = vpop.xlane.xlu0 %86
  %v88 = vsel %vm75, %v63, 0.0
  %89 = vadd.xlane.f32.xlu0 %v88
  %v90 = vpop.xlane.xlu0 %89
  %v91 = vsel %vm75, %v64, 0.0
  %92 = vadd.xlane.f32.xlu0 %v91
  %v93 = vpop.xlane.xlu0 %92
  %v94 = vsel %vm75, %v65, 0.0
  %95 = vadd.xlane.f32.xlu0 %v94
  %v96 = vpop.xlane.xlu0 %95
  %v97 = vsel %vm75, %v66, 0.0
  %98 = vadd.xlane.f32.xlu0 %v97
  %v99 = vpop.xlane.xlu0 %98
  %v100 = vsel %vm75, %v67, 0.0
  %101 = vadd.xlane.f32.xlu0 %v100
  %v102 = vpop.xlane.xlu0 %101
  %v103 = vsel %vm75, %v68, 0.0
  %104 = vadd.xlane.f32.xlu0 %v103
  %v105 = vpop.xlane.xlu0 %104
  %v106 = vsel %vm75, %v69, 0.0
  %107 = vadd.xlane.f32.xlu0 %v106
  %v108 = vpop.xlane.xlu0 %107
  %v109 = vsel %vm75, %v70, 0.0
  %110 = vadd.xlane.f32.xlu0 %v109
  %v111 = vpop.xlane.xlu0 %110
  %v112 = vsel %vm75, %v71, 0.0
  %113 = vadd.xlane.f32.xlu0 %v112
  %v114 = vpop.xlane.xlu0 %113
  %v115 = vsel %vm75, %v72, 0.0
  %116 = vadd.xlane.f32.xlu0 %v115
  %v117 = vpop.xlane.xlu0 %116
  %v118 = vsel %vm75, %v73, 0.0
  %119 = vadd.xlane.f32.xlu0 %v118
  %v120 = vpop.xlane.xlu0 %119
  %v121 = vsel %vm75, %v74, 0.0
  %122 = vadd.xlane.f32.xlu0 %v121
  %v123 = vpop.xlane.xlu0 %122
  %v124 = vmul.f32 %v78, 1.25
  %v125 = vmul.f32 %v81, 1.25
  %v126 = vmul.f32 %v84, 1.25
  %v127 = vmul.f32 %v87, 1.25
  %v128 = vmul.f32 %v90, 1.25
  %v129 = vmul.f32 %v93, 1.25
  %v130 = vmul.f32 %v96, 1.25
  %v131 = vmul.f32 %v99, 1.25
  %v132 = vmul.f32 %v102, 1.25
  %v133 = vmul.f32 %v105, 1.25
  %v134 = vmul.f32 %v108, 1.25
  %v135 = vmul.f32 %v111, 1.25
  %v136 = vmul.f32 %v114, 1.25
  %v137 = vmul.f32 %v117, 1.25
  %v138 = vmul.f32 %v120, 1.25
  %v139 = vmul.f32 %v123, 1.25
  %vm140 = vcmask 7168
  %141 = vst.msk [vmem:[%s2] sm:$0xff] %vm140, %v124
  %142 = vst.msk [vmem:[%s2 + $0x8] sm:$0xff] %vm140, %v125
  %143 = vst.msk [vmem:[%s2 + $0x10] sm:$0xff] %vm140, %v126
  %144 = vst.msk [vmem:[%s2 + $0x18] sm:$0xff] %vm140, %v127
  %145 = vst.msk [vmem:[%s2 + $0x20] sm:$0xff] %vm140, %v128
  %146 = vst.msk [vmem:[%s2 + $0x28] sm:$0xff] %vm140, %v129
  %147 = vst.msk [vmem:[%s2 + $0x30] sm:$0xff] %vm140, %v130
  %148 = vst.msk [vmem:[%s2 + $0x38] sm:$0xff] %vm140, %v131
  %149 = vst.msk [vmem:[%s2 + $0x40] sm:$0xff] %vm140, %v132
  %150 = vst.msk [vmem:[%s2 + $0x48] sm:$0xff] %vm140, %v133
  %151 = vst.msk [vmem:[%s2 + $0x50] sm:$0xff] %vm140, %v134
  %152 = vst.msk [vmem:[%s2 + $0x58] sm:$0xff] %vm140, %v135
  %153 = vst.msk [vmem:[%s2 + $0x60] sm:$0xff] %vm140, %v136
  %154 = vst.msk [vmem:[%s2 + $0x68] sm:$0xff] %vm140, %v137
  %155 = vst.msk [vmem:[%s2 + $0x70] sm:$0xff] %vm140, %v138
  %156 = vst.msk [vmem:[%s2 + $0x78] sm:$0xff] %vm140, %v139
  // Predicated region
  $region10: #{tpu_custom_call.1} parent=0 // pred_check
    _
  $region11: #{tpu_custom_call.1} parent=0 // pred_check_branch
    %158 = sbr.rel (0) target = $region13
  $region12: #{tpu_custom_call.1} parent=0 // pred_region
    _
  $region13: #{tpu_custom_call.1} parent=0 // pred_fallthru
    _
  // Predicated region
  $region14: #{tpu_custom_call.1} parent=0 // pred_check
    _
  $region15: #{tpu_custom_call.1} parent=0 // pred_check_branch
    %160 = sbr.rel (0) target = $region17
  $region16: #{tpu_custom_call.1} parent=0 // pred_region
    _
  $region17: #{tpu_custom_call.1} parent=0 // pred_fallthru
    _

</llo_original>
